<compile_context>
chip_gen: v6e
topology: v6e:2x2x1
jax: 0.10.0
libtpu: 0.0.40
codegen_flags: <defaults>
</compile_context>

<pallas_src>
import functools

import jax
import jax.numpy as jnp
from jax.experimental import pallas as pl
from jax.experimental.pallas import tpu as pltpu

COMMON_CLASSES = ['Cardiomegaly', 'Lung Opacity', 'Lung Lesion', 'Edema',
                  'Consolidation', 'Pneumonia', 'Atelectasis', 'Pneumothorax',
                  'Pleural Effusion', 'Pleural Other', 'Fracture',
                  'Support Devices', 'No Finding']
NUM_CLASSES = len(COMMON_CLASSES)           # 13
HIDDEN_SIZES = [256, 128, 64]
BN_EPS = 1e-5

OUT_PAD = 16                      # 13 logits padded to 16 (sliced in wrapper)
MAX_TILE_B = 1024                 # upper bound on the batch tile
VMEM_BUDGET_BYTES = 8 * 1024 * 1024   # conservative vs v5e 16MiB / v7x 32MiB scoped


def _round_up(n, m):
    return (n + m - 1) // m * m


def _mlp_kernel(x_ref,
                w1_ref, c1_ref,
                w2_ref, c2_ref,
                w3_ref, c3_ref,
                w4_ref, b4_ref,
                o_ref):
    """Fused 4-layer MLP forward on one (tile_b, input_size) batch tile.

    Weights carry the folded eval-mode BatchNorm scale/shift; each hidden layer
    is relu(h @ w' + c).  Matmuls run in bf16 on the MXU with f32 accumulation;
    bias add and ReLU run in f32 on the VPU.  Dropout is identity at inference.
    """
    h = x_ref[...].astype(jnp.bfloat16)   # in-kernel cast (x streamed as f32)

    def hidden(hb, w_ref, c_ref):
        z = jnp.dot(hb, w_ref[...], preferred_element_type=jnp.float32)
        z = z + c_ref[...]
        return jnp.maximum(z, 0.0).astype(jnp.bfloat16)

    h = hidden(h, w1_ref, c1_ref)
    h = hidden(h, w2_ref, c2_ref)
    h = hidden(h, w3_ref, c3_ref)
    out = jnp.dot(h, w4_ref[...], preferred_element_type=jnp.float32)
    o_ref[...] = (out + b4_ref[...]).astype(o_ref.dtype)


def init_params(key, input_size, hidden_sizes=HIDDEN_SIZES,
                num_classes=NUM_CLASSES):
    """Parameter init mirroring the PyTorch layer shapes.

    Linear weights are stored transposed vs PyTorch, i.e. (in, out).
    BatchNorm params: gamma=1, beta=0, running_mean=0, running_var=1.
    """
    params = {}
    sizes = [input_size] + list(hidden_sizes)
    keys = jax.random.split(key, len(hidden_sizes) + 1)
    for i, (din, dout) in enumerate(zip(sizes[:-1], sizes[1:])):
        kw, kb = jax.random.split(keys[i])
        bound = 1.0 / (din ** 0.5)
        params[f'w{i+1}'] = jax.random.uniform(kw, (din, dout), jnp.float32,
                                               -bound, bound)
        params[f'b{i+1}'] = jax.random.uniform(kb, (1, dout), jnp.float32,
                                               -bound, bound)
        params[f'gamma{i+1}'] = jnp.ones((1, dout), jnp.float32)
        params[f'beta{i+1}'] = jnp.zeros((1, dout), jnp.float32)
        params[f'rmean{i+1}'] = jnp.zeros((1, dout), jnp.float32)
        params[f'rvar{i+1}'] = jnp.ones((1, dout), jnp.float32)
    din = sizes[-1]
    kw, kb = jax.random.split(keys[-1])
    bound = 1.0 / (din ** 0.5)
    params['w4'] = jax.random.uniform(kw, (din, num_classes), jnp.float32,
                                      -bound, bound)
    params['b4'] = jax.random.uniform(kb, (1, num_classes), jnp.float32,
                                      -bound, bound)
    return params


def prepare_params(params):
    """Fold eval-mode BN into the weights, pad logits 13->16, cast bf16.

    Call ONCE per parameter set (outside the per-call jit); the returned tuple
    is what tabular_classifier_forward consumes.
    """
    ops = []
    for i in (1, 2, 3):
        scale = params[f'gamma{i}'] * jax.lax.rsqrt(params[f'rvar{i}'] + BN_EPS)
        shift = params[f'beta{i}'] - params[f'rmean{i}'] * scale
        w = params[f'w{i}'] * scale            # (din, dout) * (1, dout)
        c = params[f'b{i}'] * scale + shift    # (1, dout)
        ops.append(w.astype(jnp.bfloat16))     # bf16 weights for the MXU
        ops.append(c.astype(jnp.float32))      # f32 bias/shift for the VPU

    w4, b4 = params['w4'], params['b4']
    nc = w4.shape[1]
    if nc < OUT_PAD:
        w4 = jnp.pad(w4, ((0, 0), (0, OUT_PAD - nc)))
        b4 = jnp.pad(b4, ((0, 0), (0, OUT_PAD - nc)))
    ops.append(w4.astype(jnp.bfloat16))
    ops.append(b4.astype(jnp.float32))
    return tuple(ops)


def _pick_tile_b(B, D):
    """Batch tile from a VMEM budget; >=2 (even) grid steps when B allows it."""
    # Per-row VMEM bytes: double-buffered f32 x tile + double-buffered f32 out
    # tile + f32 intermediates of the three hidden layers.
    per_row = 2 * 4 * D + 2 * 4 * OUT_PAD + 4 * sum(HIDDEN_SIZES)
    vmem_cap = max(8, (VMEM_BUDGET_BYTES // per_row) // 8 * 8)
    tile = min(MAX_TILE_B, vmem_cap)
    if B <= tile:
        if B > 8:
            # Split into 2 steps so v7x's two TensorCores both get work.
            tile = _round_up(pl.cdiv(B, 2), 8)
        else:
            tile = _round_up(max(B, 1), 8)
    else:
        steps = pl.cdiv(B, tile)
        if steps % 2 == 1:
            # Even step count avoids a 2x tail imbalance across the 2 TCs.
            steps += 1
            tile = max(8, _round_up(pl.cdiv(B, steps), 8))
    return tile


@jax.jit
def tabular_classifier_forward(x, ops):
    """Fused, batch-tiled Pallas MLP forward.

    x: (batch, input_size) float32.  ops: tuple from prepare_params().
    Returns (batch, NUM_CLASSES) float32 logits.
    """
    B, D = x.shape
    tile_b = _pick_tile_b(B, D)
    grid = (pl.cdiv(B, tile_b),)

    x_spec = pl.BlockSpec((tile_b, D), lambda i: (i, 0))
    # Weights / bias vectors: same block every step -> stay VMEM-resident.
    in_specs = [x_spec] + [pl.BlockSpec(op.shape, lambda i: (0, 0))
                           for op in ops]
    out_spec = pl.BlockSpec((tile_b, OUT_PAD), lambda i: (i, 0))

    weight_bytes = sum(int(op.size) * op.dtype.itemsize for op in ops)
    flops = 2 * B * sum(int(w.shape[0] * w.shape[1]) for w in ops[0::2])
    bytes_accessed = B * (4 * D + 4 * OUT_PAD) + weight_bytes

    out = pl.pallas_call(
        _mlp_kernel,
        out_shape=jax.ShapeDtypeStruct((B, OUT_PAD), jnp.float32),
        grid=grid,
        in_specs=in_specs,
        out_specs=out_spec,
        compiler_params=pltpu.CompilerParams(
            dimension_semantics=("parallel",)),
        cost_estimate=pl.CostEstimate(flops=flops, transcendentals=0,
                                      bytes_accessed=bytes_accessed),
    )(x, *ops)

    return out[:, :NUM_CLASSES]


def reference_forward_f32(x, params):
    """Independent pure-f32 reference (PyTorch eval() semantics)."""
    h = x
    for i in range(1, 4):
        z = h @ params[f'w{i}'] + params[f'b{i}']                     # Linear
        z = (z - params[f'rmean{i}']) * jax.lax.rsqrt(params[f'rvar{i}'] + BN_EPS)
        z = z * params[f'gamma{i}'] + params[f'beta{i}']              # BatchNorm1d (eval)
        h = jnp.maximum(z, 0.0)                                       # ReLU; Dropout = identity
    return h @ params['w4'] + params['b4']


if __name__ == "__main__":
    key = jax.random.PRNGKey(0)
    kx, kp = jax.random.split(key)

    BATCH = 8
    INPUT_SIZE = 32

    x = jax.random.normal(kx, (BATCH, INPUT_SIZE), dtype=jnp.float32)
    params = init_params(kp, INPUT_SIZE)
    ops = prepare_params(params)          # BN fold / pad / bf16 cast: once

    out = tabular_classifier_forward(x, ops)
    out = jax.block_until_ready(out)

    assert out.shape == (BATCH, NUM_CLASSES), out.shape
    ref = reference_forward_f32(x, params)
    max_err = float(jnp.max(jnp.abs(out - ref)))
    # Kernel uses bf16 weights on the MXU (f32 accumulation); documented
    # tolerance vs the pure-f32 reference at these shapes.
    assert max_err < 5e-2, max_err

    print("KERNEL_OK")
</pallas_src>

<mosaic_0001>
module attributes {stable_mosaic.version = 11 : i64} {
  func.func @_mlp_kernel(%arg0: i32, %arg1: memref<8x32xf32, #tpu.memory_space<vmem>>, %arg2: memref<32x256xbf16, #tpu.memory_space<vmem>>, %arg3: memref<1x256xf32, #tpu.memory_space<vmem>>, %arg4: memref<256x128xbf16, #tpu.memory_space<vmem>>, %arg5: memref<1x128xf32, #tpu.memory_space<vmem>>, %arg6: memref<128x64xbf16, #tpu.memory_space<vmem>>, %arg7: memref<1x64xf32, #tpu.memory_space<vmem>>, %arg8: memref<64x16xbf16, #tpu.memory_space<vmem>>, %arg9: memref<1x16xf32, #tpu.memory_space<vmem>>, %arg10: memref<8x16xf32, #tpu.memory_space<vmem>>) attributes {dimension_semantics = [#tpu.dimension_semantics<parallel>], iteration_bounds = array<i64: 1>, scalar_prefetch = 0 : i64, scratch_operands = 0 : i64, tpu.core_type = #tpu.core_type<tc>, window_params = [{transform_indices = @transform_0, window_bounds = array<i64: 8, 32>}, {pipeline_mode = #tpu.pipeline_mode<synchronous>, transform_indices = @transform_1, window_bounds = array<i64: 32, 256>}, {pipeline_mode = #tpu.pipeline_mode<synchronous>, transform_indices = @transform_2, window_bounds = array<i64: 1, 256>}, {pipeline_mode = #tpu.pipeline_mode<synchronous>, transform_indices = @transform_3, window_bounds = array<i64: 256, 128>}, {pipeline_mode = #tpu.pipeline_mode<synchronous>, transform_indices = @transform_4, window_bounds = array<i64: 1, 128>}, {pipeline_mode = #tpu.pipeline_mode<synchronous>, transform_indices = @transform_5, window_bounds = array<i64: 128, 64>}, {pipeline_mode = #tpu.pipeline_mode<synchronous>, transform_indices = @transform_6, window_bounds = array<i64: 1, 64>}, {pipeline_mode = #tpu.pipeline_mode<synchronous>, transform_indices = @transform_7, window_bounds = array<i64: 64, 16>}, {pipeline_mode = #tpu.pipeline_mode<synchronous>, transform_indices = @transform_8, window_bounds = array<i64: 1, 16>}, {transform_indices = @transform_9, window_bounds = array<i64: 8, 16>}]} {
    %c0 = arith.constant 0 : index
    %c0_0 = arith.constant 0 : index
    %0 = vector.load %arg1[%c0, %c0_0] : memref<8x32xf32, #tpu.memory_space<vmem>>, vector<8x32xf32>
    %1 = arith.truncf %0 : vector<8x32xf32> to vector<8x32xbf16>
    %c0_1 = arith.constant 0 : index
    %c0_2 = arith.constant 0 : index
    %2 = vector.load %arg2[%c0_1, %c0_2] : memref<32x256xbf16, #tpu.memory_space<vmem>>, vector<32x256xbf16>
    %cst = arith.constant dense<0.000000e+00> : vector<8x256xf32>
    %3 = tpu.matmul %1, %2, %cst {dimension_numbers = #tpu.dot_dimension_numbers<[1], [0], [0], [1], [0, 0, 1, 1], [], []>} : vector<8x32xbf16>, vector<32x256xbf16>, vector<8x256xf32> -> vector<8x256xf32>
    %c0_3 = arith.constant 0 : index
    %c0_4 = arith.constant 0 : index
    %4 = vector.load %arg3[%c0_3, %c0_4] : memref<1x256xf32, #tpu.memory_space<vmem>>, vector<1x256xf32>
    %5 = vector.broadcast %4 : vector<1x256xf32> to vector<8x256xf32>
    %6 = arith.addf %3, %5 : vector<8x256xf32>
    %cst_5 = arith.constant 0.000000e+00 : f32
    %7 = vector.broadcast %cst_5 : f32 to vector<8x256xf32>
    %8 = arith.maximumf %6, %7 : vector<8x256xf32>
    %9 = arith.truncf %8 : vector<8x256xf32> to vector<8x256xbf16>
    %c0_6 = arith.constant 0 : index
    %c0_7 = arith.constant 0 : index
    %10 = vector.load %arg4[%c0_6, %c0_7] : memref<256x128xbf16, #tpu.memory_space<vmem>>, vector<256x128xbf16>
    %cst_8 = arith.constant dense<0.000000e+00> : vector<8x128xf32>
    %11 = tpu.matmul %9, %10, %cst_8 {dimension_numbers = #tpu.dot_dimension_numbers<[1], [0], [0], [1], [0, 0, 1, 1], [], []>} : vector<8x256xbf16>, vector<256x128xbf16>, vector<8x128xf32> -> vector<8x128xf32>
    %c0_9 = arith.constant 0 : index
    %c0_10 = arith.constant 0 : index
    %12 = vector.load %arg5[%c0_9, %c0_10] : memref<1x128xf32, #tpu.memory_space<vmem>>, vector<1x128xf32>
    %13 = vector.broadcast %12 : vector<1x128xf32> to vector<8x128xf32>
    %14 = arith.addf %11, %13 : vector<8x128xf32>
    %cst_11 = arith.constant 0.000000e+00 : f32
    %15 = vector.broadcast %cst_11 : f32 to vector<8x128xf32>
    %16 = arith.maximumf %14, %15 : vector<8x128xf32>
    %17 = arith.truncf %16 : vector<8x128xf32> to vector<8x128xbf16>
    %c0_12 = arith.constant 0 : index
    %c0_13 = arith.constant 0 : index
    %18 = vector.load %arg6[%c0_12, %c0_13] : memref<128x64xbf16, #tpu.memory_space<vmem>>, vector<128x64xbf16>
    %cst_14 = arith.constant dense<0.000000e+00> : vector<8x64xf32>
    %19 = tpu.matmul %17, %18, %cst_14 {dimension_numbers = #tpu.dot_dimension_numbers<[1], [0], [0], [1], [0, 0, 1, 1], [], []>} : vector<8x128xbf16>, vector<128x64xbf16>, vector<8x64xf32> -> vector<8x64xf32>
    %c0_15 = arith.constant 0 : index
    %c0_16 = arith.constant 0 : index
    %20 = vector.load %arg7[%c0_15, %c0_16] : memref<1x64xf32, #tpu.memory_space<vmem>>, vector<1x64xf32>
    %21 = vector.broadcast %20 : vector<1x64xf32> to vector<8x64xf32>
    %22 = arith.addf %19, %21 : vector<8x64xf32>
    %cst_17 = arith.constant 0.000000e+00 : f32
    %23 = vector.broadcast %cst_17 : f32 to vector<8x64xf32>
    %24 = arith.maximumf %22, %23 : vector<8x64xf32>
    %25 = arith.truncf %24 : vector<8x64xf32> to vector<8x64xbf16>
    %c0_18 = arith.constant 0 : index
    %c0_19 = arith.constant 0 : index
    %26 = vector.load %arg8[%c0_18, %c0_19] : memref<64x16xbf16, #tpu.memory_space<vmem>>, vector<64x16xbf16>
    %cst_20 = arith.constant dense<0.000000e+00> : vector<8x16xf32>
    %27 = tpu.matmul %25, %26, %cst_20 {dimension_numbers = #tpu.dot_dimension_numbers<[1], [0], [0], [1], [0, 0, 1, 1], [], []>} : vector<8x64xbf16>, vector<64x16xbf16>, vector<8x16xf32> -> vector<8x16xf32>
    %c0_21 = arith.constant 0 : index
    %c0_22 = arith.constant 0 : index
    %28 = vector.load %arg9[%c0_21, %c0_22] : memref<1x16xf32, #tpu.memory_space<vmem>>, vector<1x16xf32>
    %29 = vector.broadcast %28 : vector<1x16xf32> to vector<8x16xf32>
    %30 = arith.addf %27, %29 : vector<8x16xf32>
    %c0_23 = arith.constant 0 : index
    %c0_24 = arith.constant 0 : index
    %31 = vector.load %arg10[%c0_23, %c0_24] : memref<8x16xf32, #tpu.memory_space<vmem>>, vector<8x16xf32>
    tpu.vector_store %arg10[%c0_23, %c0_24], %30 {strides = array<i32>} : memref<8x16xf32, #tpu.memory_space<vmem>>, vector<8x16xf32>,
    return
  }
  func.func @transform_0(%arg0: i32) -> (i32, i32) {
    %c0_i32 = arith.constant 0 : i32
    %c0_i32_0 = arith.constant 0 : i32
    return %arg0, %c0_i32 : i32, i32
  }
  func.func @transform_1(%arg0: i32) -> (i32, i32) {
    %c0_i32 = arith.constant 0 : i32
    %c0_i32_0 = arith.constant 0 : i32
    %c0_i32_1 = arith.constant 0 : i32
    return %c0_i32, %c0_i32_0 : i32, i32
  }
  func.func @transform_2(%arg0: i32) -> (i32, i32) {
    %c0_i32 = arith.constant 0 : i32
    %c0_i32_0 = arith.constant 0 : i32
    %c0_i32_1 = arith.constant 0 : i32
    return %c0_i32, %c0_i32_0 : i32, i32
  }
  func.func @transform_3(%arg0: i32) -> (i32, i32) {
    %c0_i32 = arith.constant 0 : i32
    %c0_i32_0 = arith.constant 0 : i32
    %c0_i32_1 = arith.constant 0 : i32
    return %c0_i32, %c0_i32_0 : i32, i32
  }
  func.func @transform_4(%arg0: i32) -> (i32, i32) {
    %c0_i32 = arith.constant 0 : i32
    %c0_i32_0 = arith.constant 0 : i32
    %c0_i32_1 = arith.constant 0 : i32
    return %c0_i32, %c0_i32_0 : i32, i32
  }
  func.func @transform_5(%arg0: i32) -> (i32, i32) {
    %c0_i32 = arith.constant 0 : i32
    %c0_i32_0 = arith.constant 0 : i32
    %c0_i32_1 = arith.constant 0 : i32
    return %c0_i32, %c0_i32_0 : i32, i32
  }
  func.func @transform_6(%arg0: i32) -> (i32, i32) {
    %c0_i32 = arith.constant 0 : i32
    %c0_i32_0 = arith.constant 0 : i32
    %c0_i32_1 = arith.constant 0 : i32
    return %c0_i32, %c0_i32_0 : i32, i32
  }
  func.func @transform_7(%arg0: i32) -> (i32, i32) {
    %c0_i32 = arith.constant 0 : i32
    %c0_i32_0 = arith.constant 0 : i32
    %c0_i32_1 = arith.constant 0 : i32
    return %c0_i32, %c0_i32_0 : i32, i32
  }
  func.func @transform_8(%arg0: i32) -> (i32, i32) {
    %c0_i32 = arith.constant 0 : i32
    %c0_i32_0 = arith.constant 0 : i32
    %c0_i32_1 = arith.constant 0 : i32
    return %c0_i32, %c0_i32_0 : i32, i32
  }
  func.func @transform_9(%arg0: i32) -> (i32, i32) {
    %c0_i32 = arith.constant 0 : i32
    %c0_i32_0 = arith.constant 0 : i32
    return %arg0, %c0_i32 : i32, i32
  }
}

</mosaic_0001>

<llo_original>
// kernel: tabular_classifier_forward.1
$region0: #{tabular_classifier_forward.1}
  #allocation0 [shape = 'u32[]', space=smem, size = 0x4, offset = 0x4, fixed_abs, tag = 'smem constant byte address 0x4 - core index']
  #allocation1 [shape = 'u32[144,128]{1,0:T(1,128)}', space=vmem, size = 0x12000, scoped, tag = 'internal scratch']
  %s0 = inlined_call_operand.vmem [shape: f32[8,32], index: 0, kind: input, shape index: {}]
  %s1 = inlined_call_operand.hbm [shape: bf16[32,256], index: 1, kind: input, shape index: {}]
  %s2 = inlined_call_operand.vmem [shape: f32[1,256], index: 2, kind: input, shape index: {}]
  %s3 = inlined_call_operand.vmem [shape: bf16[256,128], index: 3, kind: input, shape index: {}]
  %s4 = inlined_call_operand.vmem [shape: f32[1,128], index: 4, kind: input, shape index: {}]
  %s5 = inlined_call_operand.vmem [shape: bf16[128,64], index: 5, kind: input, shape index: {}]
  %s6 = inlined_call_operand.vmem [shape: f32[1,64], index: 6, kind: input, shape index: {}]
  %s7 = inlined_call_operand.vmem [shape: bf16[64,16], index: 7, kind: input, shape index: {}]
  %s8 = inlined_call_operand.vmem [shape: f32[1,16], index: 8, kind: input, shape index: {}]
  %s9 = inlined_call_operand.hbm [shape: f32[8,16], index: 9, kind: output, shape index: {}]
  %s10 = sld [smem:[#allocation0]]
  $region50: #{tabular_classifier_forward.1} parent=0
    _
  %s12 = ssub.s32 1, %s10
  %s13 = scalar_select 0, %s12, %s10
  $region1: #{tabular_classifier_forward.1} parent=0
    #allocation2 [shape = 'u8[16384]{0}', space=vmem, size = 0x4000, scoped, tag = 'input window, operand 1, single buffered']
    #allocation3 [shape = 's32[1]{0}', space=sflag, size = 0x4, scoped, tag = 'scoped memory for tabular_classifier_forward.1']
    #allocation4 [shape = 's32[1]{0}', space=sflag, size = 0x4, scoped, tag = 'scoped memory for tabular_classifier_forward.1']
    #allocation5 [shape = 'u8[4096]{0}', space=vmem, size = 0x1000, scoped, tag = 'output window, operand 0, single buffered']
    %14 = vsyncpa [#allocation3], 0
    %15 = vsyncpa [#allocation4], 0
    // Predicated region
    $region2: #{tabular_classifier_forward.1} parent=1 // pred_check
      _
    $region3: #{tabular_classifier_forward.1} parent=1 // pred_check_branch
      %17 = sbr.rel (0) target = $region5
    $region4: #{tabular_classifier_forward.1} parent=1 // pred_region
      _
    $region5: #{tabular_classifier_forward.1} parent=1 // pred_fallthru
      _
    // Predicated region
    $region6: #{tabular_classifier_forward.1} parent=1 // pred_check
      _
    $region7: #{tabular_classifier_forward.1} parent=1 // pred_check_branch
      %19 = sbr.rel (0) target = $region9
    $region8: #{tabular_classifier_forward.1} parent=1 // pred_region
      %s21 = ssub.s32 512, 512
      %22 = vsyncadd [#allocation3], %s21
      %s23 = sshll.u32 [#allocation2], 4
      %s24 = int_to_ptr.vmem [resolvable:$true] %s23
      %29 = dma.hbm_to_vmem [thread:$0]  %s1, 512, %s24, [#allocation3], 128, 128, 8
    $region9: #{tabular_classifier_forward.1} parent=1 // pred_fallthru
      _
    // Predicated region
    $region10: #{tabular_classifier_forward.1} parent=1 // pred_check
      _
    $region11: #{tabular_classifier_forward.1} parent=1 // pred_check_branch
      %31 = sbr.rel (0) target = $region13
    $region12: #{tabular_classifier_forward.1} parent=1 // pred_region
      _
    $region13: #{tabular_classifier_forward.1} parent=1 // pred_fallthru
      _
    // Predicated region
    $region14: #{tabular_classifier_forward.1} parent=1 // pred_check
      _
    $region15: #{tabular_classifier_forward.1} parent=1 // pred_check_branch
      %33 = sbr.rel (0) target = $region17
    $region16: #{tabular_classifier_forward.1} parent=1 // pred_region
      _
    $region17: #{tabular_classifier_forward.1} parent=1 // pred_fallthru
      _
    // Predicated region
    $region18: #{tabular_classifier_forward.1} parent=1 // pred_check
      _
    $region19: #{tabular_classifier_forward.1} parent=1 // pred_check_branch
      %35 = sbr.rel (0) target = $region21
    $region20: #{tabular_classifier_forward.1} parent=1 // pred_region
      _
    $region21: #{tabular_classifier_forward.1} parent=1 // pred_fallthru
      _
    // Predicated region
    $region22: #{tabular_classifier_forward.1} parent=1 // pred_check
      _
    $region23: #{tabular_classifier_forward.1} parent=1 // pred_check_branch
      %37 = sbr.rel (0) target = $region25
    $region24: #{tabular_classifier_forward.1} parent=1 // pred_region
      _
    $region25: #{tabular_classifier_forward.1} parent=1 // pred_fallthru
      _
    // Predicated region
    $region26: #{tabular_classifier_forward.1} parent=1 // pred_check
      _
    $region27: #{tabular_classifier_forward.1} parent=1 // pred_check_branch
      %39 = sbr.rel (0) target = $region29
    $region28: #{tabular_classifier_forward.1} parent=1 // pred_region
      _
    $region29: #{tabular_classifier_forward.1} parent=1 // pred_fallthru
      _
    // Predicated region
    $region30: #{tabular_classifier_forward.1} parent=1 // pred_check
      _
    $region31: #{tabular_classifier_forward.1} parent=1 // pred_check_branch
      %41 = sbr.rel (0) target = $region33
    $region32: #{tabular_classifier_forward.1} parent=1 // pred_region
      _
    $region33: #{tabular_classifier_forward.1} parent=1 // pred_fallthru
      _
    // Predicated region
    $region34: #{tabular_classifier_forward.1} parent=1 // pred_check
      _
    $region35: #{tabular_classifier_forward.1} parent=1 // pred_check_branch
      %43 = sbr.rel (0) target = $region37
    $region36: #{tabular_classifier_forward.1} parent=1 // pred_region
      _
    $region37: #{tabular_classifier_forward.1} parent=1 // pred_fallthru
      _
    // Predicated region
    $region38: #{tabular_classifier_forward.1} parent=1 // pred_check
      _
    $region39: #{tabular_classifier_forward.1} parent=1 // pred_check_branch
      %45 = sbr.rel (0) target = $region41
    $region40: #{tabular_classifier_forward.1} parent=1 // pred_region
      %46 = dma.done [#allocation3], 512
    $region41: #{tabular_classifier_forward.1} parent=1 // pred_fallthru
      _
    %v48 = vld [vmem:[%s0] sm:$0xff]
    %v49 = vpack.c.bf16 %v48, %v48
    %v50 = vld [vmem:[#allocation2] sm:$0xff]
    %v51 = vld [vmem:[#allocation2 + $0x8] sm:$0xff]
    %v52 = vld [vmem:[#allocation2 + $0x10] sm:$0xff]
    %v53 = vld [vmem:[#allocation2 + $0x18] sm:$0xff]
    %v54 = vld [vmem:[%s2] sm:$0x3]
    %v56 = vlaneseq
    %v57 = vshrl.u32 %v56, 7
    %v58 = vsub.s32 0, %v57
    %v59 = vrot.slane %v54, %v58
    %v60 = vlaneseq
    %v61 = vshrl.u32 %v60, 7
    %v62 = vsub.s32 1, %v61
    %v63 = vrot.slane %v54, %v62
    %v70 = vunpack.c.l.b16 %v50
    %v71 = vunpack.c.h.b16 %v50
    %v72 = vunpack.c.l.b16 %v51
    %v73 = vunpack.c.h.b16 %v51
    %v74 = vunpack.c.l.b16 %v52
    %v75 = vunpack.c.h.b16 %v52
    %v76 = vunpack.c.l.b16 %v53
    %v77 = vunpack.c.h.b16 %v53
    %v78 = vpack.c.b16 %v72, %v70
    %v79 = vpack.c.b16 %v73, %v71
    %v80 = vpack.c.b16 %v76, %v74
    %v81 = vpack.c.b16 %v77, %v75
    %vm86 = vcmask 261120
    %v88 = vsel %vm86, %v49, 0
    %90 = vmatprep.subr.bf16.mxu0 0
    %91 = vmatpush1.bf16.msra.mxu0 0
    %92 = vmatprep.subr.bf16.mxu0 0
    %93 = vmatpush1.bf16.msra.mxu0 0
    %94 = vmatprep.subr.bf16.mxu0 0
    %95 = vmatpush1.bf16.msra.mxu0 0
    %96 = vmatprep.subr.bf16.mxu0 0
    %97 = vmatpush1.bf16.msra.mxu0 0
    %98 = vmatprep.subr.bf16.mxu0 0
    %99 = vmatpush1.bf16.msra.mxu0 0
    %100 = vmatprep.subr.bf16.mxu0 0
    %101 = vmatpush1.bf16.msra.mxu0 0
    %102 = vmatprep.subr.bf16.mxu0 %v81
    %103 = vmatpush1.bf16.msra.mxu0 %v80
    %104 = vmatprep.subr.bf16.mxu0 %v79
    %105 = vmatpush1.bf16.msra.mxu0 %v78
    %106 = vmatprep.subr.bf16.mxu0 0
    %107 = vmatpush2.bf16.msra.mxu0 0
    %108 = vmatprep.subr.bf16.mxu0 0
    %109 = vmatpush2.bf16.msra.mxu0 0
    %110 = vmatprep.subr.bf16.mxu0 0
    %111 = vmatpush2.bf16.msra.mxu0 0
    %112 = vmatprep.subr.bf16.mxu0 0
    %113 = vmatpush2.bf16.msra.mxu0 0
    %114 = vmatprep.subr.bf16.mxu0 0
    %115 = vmatpush2.bf16.msra.mxu0 0
    %116 = vmatprep.subr.bf16.mxu0 0
    %117 = vmatpush2.bf16.msra.mxu0 0
    %118 = vmatprep.subr.bf16.mxu0 0
    %119 = vmatpush2.bf16.msra.mxu0 0
    %120 = vmatprep.subr.bf16.mxu0 0
    %121 = vmatpush2.bf16.msra.mxu0 0
    %122 = vmatprep.mubr.bf16.mxu0 0
    %123 = vmatmul.mubr.bf16.gmra.mxu0 %v88
    %v124 = vpop.f32.mrf.mxu0
    %v125 = vadd.f32 %v59, %v124
    %v126 = vpop.f32.mrf.mxu0
    %v127 = vadd.f32 %v63, %v126
    %v128 = vpop.f32.mrf.mxu0
    %v129 = vpop.f32.mrf.mxu0
    %130 = vdwg.mxu0
    %v131 = vmax.f32 %v125, 0.0
    %v132 = vmax.f32 %v127, 0.0
    %v133 = vpack.c.bf16 %v131, %v131
    %v134 = vpack.c.bf16 %v132, %v132
    %v135 = vld [vmem:[%s3] sm:$0xf]
    %v136 = vld [vmem:[%s3 + $0x4] sm:$0xf]
    %v137 = vld [vmem:[%s3 + $0x8] sm:$0xf]
    %v138 = vld [vmem:[%s3 + $0xc] sm:$0xf]
    %v139 = vld [vmem:[%s3 + $0x10] sm:$0xf]
    %v140 = vld [vmem:[%s3 + $0x14] sm:$0xf]
    %v141 = vld [vmem:[%s3 + $0x18] sm:$0xf]
    %v142 = vld [vmem:[%s3 + $0x1c] sm:$0xf]
    %v143 = vld [vmem:[%s3 + $0x20] sm:$0xf]
    %v144 = vld [vmem:[%s3 + $0x24] sm:$0xf]
    %v145 = vld [vmem:[%s3 + $0x28] sm:$0xf]
    %v146 = vld [vmem:[%s3 + $0x2c] sm:$0xf]
    %v147 = vld [vmem:[%s3 + $0x30] sm:$0xf]
    %v148 = vld [vmem:[%s3 + $0x34] sm:$0xf]
    %v149 = vld [vmem:[%s3 + $0x38] sm:$0xf]
    %v150 = vld [vmem:[%s3 + $0x3c] sm:$0xf]
    %v151 = vld [vmem:[%s3 + $0x40] sm:$0xf]
    %v152 = vld [vmem:[%s3 + $0x44] sm:$0xf]
    %v153 = vld [vmem:[%s3 + $0x48] sm:$0xf]
    %v154 = vld [vmem:[%s3 + $0x4c] sm:$0xf]
    %v155 = vld [vmem:[%s3 + $0x50] sm:$0xf]
    %v156 = vld [vmem:[%s3 + $0x54] sm:$0xf]
    %v157 = vld [vmem:[%s3 + $0x58] sm:$0xf]
    %v158 = vld [vmem:[%s3 + $0x5c] sm:$0xf]
    %v159 = vld [vmem:[%s3 + $0x60] sm:$0xf]
    %v160 = vld [vmem:[%s3 + $0x64] sm:$0xf]
    %v161 = vld [vmem:[%s3 + $0x68] sm:$0xf]
    %v162 = vld [vmem:[%s3 + $0x6c] sm:$0xf]
    %v163 = vld [vmem:[%s3 + $0x70] sm:$0xf]
    %v164 = vld [vmem:[%s3 + $0x74] sm:$0xf]
    %v165 = vld [vmem:[%s3 + $0x78] sm:$0xf]
    %v166 = vld [vmem:[%s3 + $0x7c] sm:$0xf]
    %v167 = vld [vmem:[%s4] sm:$0x1]
    %v169 = vlaneseq
    %v170 = vshrl.u32 %v169, 7
    %v171 = vsub.s32 0, %v170
    %v172 = vrot.slane %v167, %v171
    %v206 = vunpack.c.l.b16 %v135
    %v207 = vunpack.c.l.b16 %v136
    %v208 = vunpack.c.l.b16 %v137
    %v209 = vunpack.c.l.b16 %v138
    %v210 = vunpack.c.l.b16 %v139
    %v211 = vunpack.c.l.b16 %v140
    %v212 = vunpack.c.l.b16 %v141
    %v213 = vunpack.c.l.b16 %v142
    %v214 = vunpack.c.l.b16 %v143
    %v215 = vunpack.c.l.b16 %v144
    %v216 = vunpack.c.l.b16 %v145
    %v217 = vunpack.c.l.b16 %v146
    %v218 = vunpack.c.l.b16 %v147
    %v219 = vunpack.c.l.b16 %v148
    %v220 = vunpack.c.l.b16 %v149
    %v221 = vunpack.c.l.b16 %v150
    %v222 = vunpack.c.l.b16 %v151
    %v223 = vunpack.c.l.b16 %v152
    %v224 = vunpack.c.l.b16 %v153
    %v225 = vunpack.c.l.b16 %v154
    %v226 = vunpack.c.l.b16 %v155
    %v227 = vunpack.c.l.b16 %v156
    %v228 = vunpack.c.l.b16 %v157
    %v229 = vunpack.c.l.b16 %v158
    %v230 = vunpack.c.l.b16 %v159
    %v231 = vunpack.c.l.b16 %v160
    %v232 = vunpack.c.l.b16 %v161
    %v233 = vunpack.c.l.b16 %v162
    %v234 = vunpack.c.l.b16 %v163
    %v235 = vunpack.c.l.b16 %v164
    %v236 = vunpack.c.l.b16 %v165
    %v237 = vunpack.c.l.b16 %v166
    %v238 = vpack.c.b16 %v207, %v206
    %v239 = vpack.c.b16 %v209, %v208
    %v240 = vpack.c.b16 %v211, %v210
    %v241 = vpack.c.b16 %v213, %v212
    %v242 = vpack.c.b16 %v215, %v214
    %v243 = vpack.c.b16 %v217, %v216
    %v244 = vpack.c.b16 %v219, %v218
    %v245 = vpack.c.b16 %v221, %v220
    %v246 = vpack.c.b16 %v223, %v222
    %v247 = vpack.c.b16 %v225, %v224
    %v248 = vpack.c.b16 %v227, %v226
    %v249 = vpack.c.b16 %v229, %v228
    %v250 = vpack.c.b16 %v231, %v230
    %v251 = vpack.c.b16 %v233, %v232
    %v252 = vpack.c.b16 %v235, %v234
    %v253 = vpack.c.b16 %v237, %v236
    %270 = vmatprep.subr.bf16.mxu0 0
    %271 = vmatpush1.bf16.msra.mxu0 %v245
    %272 = vmatprep.subr.bf16.mxu0 0
    %273 = vmatpush1.bf16.msra.mxu0 %v244
    %274 = vmatprep.subr.bf16.mxu0 0
    %275 = vmatpush1.bf16.msra.mxu0 %v243
    %276 = vmatprep.subr.bf16.mxu0 0
    %277 = vmatpush1.bf16.msra.mxu0 %v242
    %278 = vmatprep.subr.bf16.mxu0 0
    %279 = vmatpush1.bf16.msra.mxu0 %v241
    %280 = vmatprep.subr.bf16.mxu0 0
    %281 = vmatpush1.bf16.msra.mxu0 %v240
    %282 = vmatprep.subr.bf16.mxu0 0
    %283 = vmatpush1.bf16.msra.mxu0 %v239
    %284 = vmatprep.subr.bf16.mxu0 0
    %285 = vmatpush1.bf16.msra.mxu0 %v238
    %286 = vmatprep.subr.bf16.mxu0 0
    %287 = vmatpush2.bf16.msra.mxu0 %v253
    %288 = vmatprep.subr.bf16.mxu0 0
    %289 = vmatpush2.bf16.msra.mxu0 %v252
    %290 = vmatprep.subr.bf16.mxu0 0
    %291 = vmatpush2.bf16.msra.mxu0 %v251
    %292 = vmatprep.subr.bf16.mxu0 0
    %293 = vmatpush2.bf16.msra.mxu0 %v250
    %294 = vmatprep.subr.bf16.mxu0 0
    %295 = vmatpush2.bf16.msra.mxu0 %v249
    %296 = vmatprep.subr.bf16.mxu0 0
    %297 = vmatpush2.bf16.msra.mxu0 %v248
    %298 = vmatprep.subr.bf16.mxu0 0
    %299 = vmatpush2.bf16.msra.mxu0 %v247
    %300 = vmatprep.subr.bf16.mxu0 0
    %301 = vmatpush2.bf16.msra.mxu0 %v246
    %302 = vmatprep.mubr.bf16.mxu0 %v134
    %303 = vmatmul.mubr.bf16.gmra.mxu0 %v133
    %v304 = vpop.f32.mrf.mxu0
    %v305 = vadd.f32 %v172, %v304
    %v306 = vpop.f32.mrf.mxu0
    %v307 = vpop.f32.mrf.mxu0
    %v308 = vpop.f32.mrf.mxu0
    %309 = vdwg.mxu0
    %v310 = vmax.f32 %v305, 0.0
    %v311 = vpack.c.bf16 %v310, %v310
    %v312 = vld [vmem:[%s5] sm:$0xf]
    %v313 = vld [vmem:[%s5 + $0x4] sm:$0xf]
    %v314 = vld [vmem:[%s5 + $0x8] sm:$0xf]
    %v315 = vld [vmem:[%s5 + $0xc] sm:$0xf]
    %v316 = vld [vmem:[%s5 + $0x10] sm:$0xf]
    %v317 = vld [vmem:[%s5 + $0x14] sm:$0xf]
    %v318 = vld [vmem:[%s5 + $0x18] sm:$0xf]
    %v319 = vld [vmem:[%s5 + $0x1c] sm:$0xf]
    %v320 = vld [vmem:[%s5 + $0x20] sm:$0xf]
    %v321 = vld [vmem:[%s5 + $0x24] sm:$0xf]
    %v322 = vld [vmem:[%s5 + $0x28] sm:$0xf]
    %v323 = vld [vmem:[%s5 + $0x2c] sm:$0xf]
    %v324 = vld [vmem:[%s5 + $0x30] sm:$0xf]
    %v325 = vld [vmem:[%s5 + $0x34] sm:$0xf]
    %v326 = vld [vmem:[%s5 + $0x38] sm:$0xf]
    %v327 = vld [vmem:[%s5 + $0x3c] sm:$0xf]
    %v328 = vld [vmem:[%s6] sm:$0x1]
    %v330 = vlaneseq
    %v331 = vshrl.u32 %v330, 7
    %v332 = vsub.s32 0, %v331
    %v333 = vrot.slane %v328, %v332
    %v351 = vunpack.c.l.b16 %v312
    %v352 = vunpack.c.l.b16 %v313
    %v353 = vunpack.c.l.b16 %v314
    %v354 = vunpack.c.l.b16 %v315
    %v355 = vunpack.c.l.b16 %v316
    %v356 = vunpack.c.l.b16 %v317
    %v357 = vunpack.c.l.b16 %v318
    %v358 = vunpack.c.l.b16 %v319
    %v359 = vunpack.c.l.b16 %v320
    %v360 = vunpack.c.l.b16 %v321
    %v361 = vunpack.c.l.b16 %v322
    %v362 = vunpack.c.l.b16 %v323
    %v363 = vunpack.c.l.b16 %v324
    %v364 = vunpack.c.l.b16 %v325
    %v365 = vunpack.c.l.b16 %v326
    %v366 = vunpack.c.l.b16 %v327
    %v367 = vpack.c.b16 %v352, %v351
    %v368 = vpack.c.b16 %v354, %v353
    %v369 = vpack.c.b16 %v356, %v355
    %v370 = vpack.c.b16 %v358, %v357
    %v371 = vpack.c.b16 %v360, %v359
    %v372 = vpack.c.b16 %v362, %v361
    %v373 = vpack.c.b16 %v364, %v363
    %v374 = vpack.c.b16 %v366, %v365
    %383 = vmatprep.subr.bf16.mxu0 0
    %384 = vmatpush1.bf16.msra.mxu0 %v374
    %385 = vmatprep.subr.bf16.mxu0 0
    %386 = vmatpush1.bf16.msra.mxu0 %v373
    %387 = vmatprep.subr.bf16.mxu0 0
    %388 = vmatpush1.bf16.msra.mxu0 %v372
    %389 = vmatprep.subr.bf16.mxu0 0
    %390 = vmatpush1.bf16.msra.mxu0 %v371
    %391 = vmatprep.subr.bf16.mxu0 0
    %392 = vmatpush1.bf16.msra.mxu0 %v370
    %393 = vmatprep.subr.bf16.mxu0 0
    %394 = vmatpush1.bf16.msra.mxu0 %v369
    %395 = vmatprep.subr.bf16.mxu0 0
    %396 = vmatpush1.bf16.msra.mxu0 %v368
    %397 = vmatprep.subr.bf16.mxu0 0
    %398 = vmatpush1.bf16.msra.mxu0 %v367
    %399 = vmatprep.subr.bf16.mxu0 0
    %400 = vmatpush2.bf16.msra.mxu0 0
    %401 = vmatprep.subr.bf16.mxu0 0
    %402 = vmatpush2.bf16.msra.mxu0 0
    %403 = vmatprep.subr.bf16.mxu0 0
    %404 = vmatpush2.bf16.msra.mxu0 0
    %405 = vmatprep.subr.bf16.mxu0 0
    %406 = vmatpush2.bf16.msra.mxu0 0
    %407 = vmatprep.subr.bf16.mxu0 0
    %408 = vmatpush2.bf16.msra.mxu0 0
    %409 = vmatprep.subr.bf16.mxu0 0
    %410 = vmatpush2.bf16.msra.mxu0 0
    %411 = vmatprep.subr.bf16.mxu0 0
    %412 = vmatpush2.bf16.msra.mxu0 0
    %413 = vmatprep.subr.bf16.mxu0 0
    %414 = vmatpush2.bf16.msra.mxu0 0
    %415 = vmatprep.mubr.bf16.mxu0 0
    %416 = vmatmul.mubr.bf16.gmra.mxu0 %v311
    %v417 = vpop.f32.mrf.mxu0
    %v418 = vadd.f32 %v333, %v417
    %v419 = vpop.f32.mrf.mxu0
    %v420 = vpop.f32.mrf.mxu0
    %v421 = vpop.f32.mrf.mxu0
    %422 = vdwg.mxu0
    %v423 = vmax.f32 %v418, 0.0
    %v424 = vpack.c.bf16 %v423, %v423
    %v425 = vld [vmem:[%s7] sm:$0xf]
    %v426 = vld [vmem:[%s7 + $0x4] sm:$0xf]
    %v427 = vld [vmem:[%s7 + $0x8] sm:$0xf]
    %v428 = vld [vmem:[%s7 + $0xc] sm:$0xf]
    %v429 = vld [vmem:[%s7 + $0x10] sm:$0xf]
    %v430 = vld [vmem:[%s7 + $0x14] sm:$0xf]
    %v431 = vld [vmem:[%s7 + $0x18] sm:$0xf]
    %v432 = vld [vmem:[%s7 + $0x1c] sm:$0xf]
    %v433 = vld [vmem:[%s8] sm:$0x1]
    %v435 = vlaneseq
    %v436 = vshrl.u32 %v435, 7
    %v437 = vsub.s32 0, %v436
    %v438 = vrot.slane %v433, %v437
    %v448 = vunpack.c.l.b16 %v425
    %v449 = vunpack.c.l.b16 %v426
    %v450 = vunpack.c.l.b16 %v427
    %v451 = vunpack.c.l.b16 %v428
    %v452 = vunpack.c.l.b16 %v429
    %v453 = vunpack.c.l.b16 %v430
    %v454 = vunpack.c.l.b16 %v431
    %v455 = vunpack.c.l.b16 %v432
    %v456 = vpack.c.b16 %v449, %v448
    %v457 = vpack.c.b16 %v451, %v450
    %v458 = vpack.c.b16 %v453, %v452
    %v459 = vpack.c.b16 %v455, %v454
    %vm464 = vcmask 523264
    %v466 = vsel %vm464, %v424, 0
    %468 = vmatprep.subr.bf16.mxu0 0
    %469 = vmatpush1.bf16.msra.mxu0 0
    %470 = vmatprep.subr.bf16.mxu0 0
    %471 = vmatpush1.bf16.msra.mxu0 0
    %472 = vmatprep.subr.bf16.mxu0 0
    %473 = vmatpush1.bf16.msra.mxu0 0
    %474 = vmatprep.subr.bf16.mxu0 0
    %475 = vmatpush1.bf16.msra.mxu0 0
    %476 = vmatprep.subr.bf16.mxu0 0
    %477 = vmatpush1.bf16.msra.mxu0 %v459
    %478 = vmatprep.subr.bf16.mxu0 0
    %479 = vmatpush1.bf16.msra.mxu0 %v458
    %480 = vmatprep.subr.bf16.mxu0 0
    %481 = vmatpush1.bf16.msra.mxu0 %v457
    %482 = vmatprep.subr.bf16.mxu0 0
    %483 = vmatpush1.bf16.msra.mxu0 %v456
    %484 = vmatprep.subr.bf16.mxu0 0
    %485 = vmatpush2.bf16.msra.mxu0 0
    %486 = vmatprep.subr.bf16.mxu0 0
    %487 = vmatpush2.bf16.msra.mxu0 0
    %488 = vmatprep.subr.bf16.mxu0 0
    %489 = vmatpush2.bf16.msra.mxu0 0
    %490 = vmatprep.subr.bf16.mxu0 0
    %491 = vmatpush2.bf16.msra.mxu0 0
    %492 = vmatprep.subr.bf16.mxu0 0
    %493 = vmatpush2.bf16.msra.mxu0 0
    %494 = vmatprep.subr.bf16.mxu0 0
    %495 = vmatpush2.bf16.msra.mxu0 0
    %496 = vmatprep.subr.bf16.mxu0 0
    %497 = vmatpush2.bf16.msra.mxu0 0
    %498 = vmatprep.subr.bf16.mxu0 0
    %499 = vmatpush2.bf16.msra.mxu0 0
    %500 = vmatprep.mubr.bf16.mxu0 0
    %501 = vmatmul.mubr.bf16.gmra.mxu0 %v466
    %v502 = vpop.f32.mrf.mxu0
    %v503 = vadd.f32 %v438, %v502
    %v504 = vpop.f32.mrf.mxu0
    %v505 = vpop.f32.mrf.mxu0
    %v506 = vpop.f32.mrf.mxu0
    %507 = vdwg.mxu0
    %vm508 = vcmask 130048
    %509 = vst.msk [vmem:[#allocation5] sm:$0xff] %vm508, %v503
    // Predicated region
    $region42: #{tabular_classifier_forward.1} parent=1 // pred_check
      _
    $region43: #{tabular_classifier_forward.1} parent=1 // pred_check_branch
      %511 = sbr.rel (0) target = $region45
    $region44: #{tabular_classifier_forward.1} parent=1 // pred_region
      %s513 = ssub.s32 128, 128
      %514 = vsyncadd [#allocation4], %s513
      %s516 = sshll.u32 [#allocation5], 4
      %s517 = int_to_ptr.vmem [resolvable:$true] %s516
      %519 = dma.vmem_to_hbm [thread:$0]  %s517, 128, %s9, [#allocation4]
    $region45: #{tabular_classifier_forward.1} parent=1 // pred_fallthru
      _
    // Predicated region
    $region46: #{tabular_classifier_forward.1} parent=1 // pred_check
      _
    $region47: #{tabular_classifier_forward.1} parent=1 // pred_check_branch
      %521 = sbr.rel (0) target = $region49
    $region48: #{tabular_classifier_forward.1} parent=1 // pred_region
      %522 = dma.done [#allocation4], 128
    $region49: #{tabular_classifier_forward.1} parent=1 // pred_fallthru
      _
    %523 = vsyncpa [#allocation3], 1
    %524 = vsyncpa [#allocation4], 1

</llo_original>
